<compile_context>
chip_gen: v5e
topology: v5e:2x2
jax: 0.10.0
libtpu: 0.0.40
codegen_flags: <defaults>
</compile_context>

<pallas_src>
import jax
import jax.numpy as jnp
from jax import lax
from jax.experimental import pallas as pl
from jax.experimental.pallas import tpu as pltpu


# ----------------------------------------------------------------------------
# Kernels
# ----------------------------------------------------------------------------

def _gather_kernel(idx_ref, x_ref, o_ref):
    # idx_ref: SMEM (1,) int32 -- consumed by the input index_map, unused here.
    # x_ref:   VMEM (TB, K) block = x[b*TB:(b+1)*TB, idx, :]  (already gathered
    #          by the data-dependent BlockSpec; pipelined/double-buffered DMA).
    # o_ref:   VMEM (TB, K) output block.
    del idx_ref
    o_ref[...] = x_ref[...].astype(o_ref.dtype)


def _weighted_select_kernel(x_ref, w_ref, o_ref):
    # Exact einsum('btk,t->bk') on a contiguous (TB, T, K) block. Used for the
    # small / non-lane-aligned-K cases; compute is negligible vs. the DMA.
    x = x_ref[...].astype(jnp.float32)            # (TB, T, K)
    w = w_ref[...].astype(jnp.float32)            # (1, T)
    o_ref[...] = (x * w[:, :, None]).sum(axis=1).astype(o_ref.dtype)


# ----------------------------------------------------------------------------
# Tiling helpers
# ----------------------------------------------------------------------------

_VMEM_BUDGET_BYTES = 8 * 1024 * 1024   # stays well under v5e's 16 MiB scoped default


def _round_up(n, m):
    return -(-n // m) * m


def _batch_tile(B, row_bytes):
    """Rows per grid step.

    row_bytes: VMEM bytes needed per batch row for all blocks of one step
    (inputs + output). Double-buffering is accounted for here (factor 2).
    """
    if B <= 8:
        return B
    tb = _VMEM_BUDGET_BYTES // max(1, 2 * row_bytes)
    tb = max(8, min(tb, 2048))
    tb = (tb // 8) * 8
    # Keep >= 2 grid steps so the "parallel" axis gives both v7x TCs work.
    half = _round_up(_round_up(B, 2) // 2, 8)
    tb = min(tb, max(8, half))
    return max(8, tb)


# ----------------------------------------------------------------------------
# Pallas paths
# ----------------------------------------------------------------------------

def _select_gather(x, idx, out_dtype):
    """Row gather via data-dependent input BlockSpec. Requires K % 128 == 0."""
    B, T, K = x.shape
    in_item = jnp.dtype(x.dtype).itemsize
    out_item = jnp.dtype(out_dtype).itemsize

    x2 = x.reshape(B, T * K)                      # free row-major view
    TB = _batch_tile(B, K * (in_item + out_item))
    grid = (pl.cdiv(B, TB),)

    out2d = pl.pallas_call(
        _gather_kernel,
        out_shape=jax.ShapeDtypeStruct((B, K), out_dtype),
        grid_spec=pltpu.PrefetchScalarGridSpec(
            num_scalar_prefetch=1,                # idx lives in SMEM
            grid=grid,
            in_specs=[
                # Column-block index = idx -> elements [idx*K, idx*K+K), i.e.
                # exactly x[:, idx, :]. Lane-dense (K % 128 == 0), sublane-dense.
                pl.BlockSpec((TB, K), lambda b, idx_ref: (b, idx_ref[0])),
            ],
            out_specs=pl.BlockSpec((TB, K), lambda b, idx_ref: (b, 0)),
        ),
        compiler_params=pltpu.CompilerParams(
            dimension_semantics=("parallel",),
            vmem_limit_bytes=32 * 1024 * 1024,
        ),
        cost_estimate=pl.CostEstimate(
            flops=0,
            transcendentals=0,
            bytes_accessed=int(B * K * (in_item + out_item)),
        ),
    )(idx, x2)
    return out2d


def _select_weighted(x, W, out_dtype):
    """Exact weighted selection on contiguous (TB, T, K) blocks."""
    B, T, K = x.shape
    in_item = jnp.dtype(x.dtype).itemsize
    out_item = jnp.dtype(out_dtype).itemsize

    w2 = W.reshape(1, T)
    TB = _batch_tile(B, T * K * in_item + K * out_item)
    grid = (pl.cdiv(B, TB),)

    out2d = pl.pallas_call(
        _weighted_select_kernel,
        out_shape=jax.ShapeDtypeStruct((B, K), out_dtype),
        grid_spec=pltpu.PrefetchScalarGridSpec(
            num_scalar_prefetch=0,
            grid=grid,
            in_specs=[
                pl.BlockSpec((TB, T, K), lambda b: (b, 0, 0)),
                pl.BlockSpec((1, T), lambda b: (0, 0)),
            ],
            out_specs=pl.BlockSpec((TB, K), lambda b: (b, 0)),
        ),
        compiler_params=pltpu.CompilerParams(
            dimension_semantics=("parallel",),
            vmem_limit_bytes=32 * 1024 * 1024,
        ),
        cost_estimate=pl.CostEstimate(
            flops=int(2 * B * T * K),
            transcendentals=0,
            bytes_accessed=int(B * T * K * in_item + B * K * out_item),
        ),
    )(x, w2)
    return out2d


# ----------------------------------------------------------------------------
# Public wrapper (matches SampleSelect_Layer.forward)
# ----------------------------------------------------------------------------

def sample_select(x, W, *, min_pallas_bytes=1 << 20):
    """x: (B, T, K); W: (T,) one-hot weights -> (B, 1, K).

    Matches torch.einsum('ijk,j->ik', x, W).unsqueeze(1). The gather fast path
    assumes W is strictly one-hot with value 1.0 (as constructed by the
    module); the weighted path handles arbitrary W exactly.
    """
    B, T, K = x.shape
    assert W.shape == (T,), (W.shape, T)
    out_dtype = jnp.promote_types(x.dtype, W.dtype)   # torch dtype promotion
    in_item = jnp.dtype(x.dtype).itemsize

    idx = jnp.argmax(W).astype(jnp.int32)              # one-hot -> index

    # Tiny-shape bail-out: kernel dispatch dominates; XLA's dynamic slice
    # fuses with neighbours and wins.
    if B * K * in_item < min_pallas_bytes:
        return lax.dynamic_slice_in_dim(x, idx, 1, axis=1).astype(out_dtype)

    if K % 128 == 0:
        out2d = _select_gather(x, idx.reshape((1,)), out_dtype)     # B*K traffic
    else:
        # TODO(synk): for K not a multiple of 128 with very large T this reads
        # the full B*T*K; a lane-padded gather block would cut that further.
        out2d = _select_weighted(x, W, out_dtype)
    return out2d.reshape(B, 1, K)


def make_sample_select_weight(dim, idx, dtype=jnp.float32):
    """Deterministic parameter init matching SampleSelect_Layer.__init__."""
    return jnp.zeros((dim,), dtype=dtype).at[idx].set(1.0)


# ----------------------------------------------------------------------------
# Demo / correctness checks
# ----------------------------------------------------------------------------

if __name__ == "__main__":
    key = jax.random.PRNGKey(0)
    k1, k2 = jax.random.split(key)

    # Case 1: module-typical tiny shape -> XLA dynamic-slice fast path.
    B, T, K = 2, 8, 32
    idx = 3
    x = jax.random.normal(k1, (B, T, K), dtype=jnp.float32)
    W = make_sample_select_weight(T, idx)
    out = jax.block_until_ready(sample_select(x, W))
    ref = jnp.einsum('ijk,j->ik', x, W)[:, None, :]
    assert out.shape == (B, 1, K), out.shape
    assert jnp.allclose(out, ref, atol=1e-6, rtol=1e-6), "tiny path mismatch"

    # Case 2: force the Pallas weighted-select path (K % 128 != 0).
    out_w = jax.block_until_ready(sample_select(x, W, min_pallas_bytes=0))
    assert out_w.shape == (B, 1, K), out_w.shape
    assert jnp.allclose(out_w, ref, atol=1e-5, rtol=1e-5), "weighted path mismatch"

    # Case 3: Pallas gather path (lane-dense K, batch-tiled multi-step grid).
    B3, T3, K3, idx3 = 32, 8, 256, 5
    x3 = jax.random.normal(k2, (B3, T3, K3), dtype=jnp.float32)
    W3 = make_sample_select_weight(T3, idx3)
    out3 = jax.block_until_ready(sample_select(x3, W3, min_pallas_bytes=0))
    ref3 = jnp.einsum('ijk,j->ik', x3, W3)[:, None, :]
    assert out3.shape == (B3, 1, K3), out3.shape
    assert jnp.allclose(out3, ref3, atol=1e-6, rtol=1e-6), "gather path mismatch"

    print("KERNEL_OK")
</pallas_src>

<mosaic_0001>
module attributes {stable_mosaic.version = 11 : i64} {
  func.func @_weighted_select_kernel(%arg0: i32, %arg1: memref<2x8x32xf32, #tpu.memory_space<vmem>>, %arg2: memref<1x8xf32, #tpu.memory_space<vmem>>, %arg3: memref<2x32xf32, #tpu.memory_space<vmem>>) attributes {dimension_semantics = [#tpu.dimension_semantics<parallel>], iteration_bounds = array<i64: 1>, scalar_prefetch = 0 : i64, scratch_operands = 0 : i64, tpu.core_type = #tpu.core_type<tc>, window_params = [{transform_indices = @transform_0, window_bounds = array<i64: 2, 8, 32>}, {pipeline_mode = #tpu.pipeline_mode<synchronous>, transform_indices = @transform_1, window_bounds = array<i64: 1, 8>}, {transform_indices = @transform_2, window_bounds = array<i64: 2, 32>}]} {
    %c0 = arith.constant 0 : index
    %c0_0 = arith.constant 0 : index
    %c0_1 = arith.constant 0 : index
    %0 = vector.load %arg1[%c0, %c0_0, %c0_1] : memref<2x8x32xf32, #tpu.memory_space<vmem>>, vector<2x8x32xf32>
    %c0_2 = arith.constant 0 : index
    %c0_3 = arith.constant 0 : index
    %1 = vector.load %arg2[%c0_2, %c0_3] : memref<1x8xf32, #tpu.memory_space<vmem>>, vector<1x8xf32>
    %2 = vector.shape_cast %1 : vector<1x8xf32> to vector<1x8x1xf32>
    %3 = vector.broadcast %2 : vector<1x8x1xf32> to vector<2x8x32xf32>
    %4 = arith.mulf %0, %3 : vector<2x8x32xf32>
    %cst = arith.constant dense<0.000000e+00> : vector<2x32xf32>
    %5 = vector.multi_reduction <add>, %4, %cst [1] : vector<2x8x32xf32> to vector<2x32xf32>
    %c0_4 = arith.constant 0 : index
    %c0_5 = arith.constant 0 : index
    %6 = vector.load %arg3[%c0_4, %c0_5] : memref<2x32xf32, #tpu.memory_space<vmem>>, vector<2x32xf32>
    tpu.vector_store %arg3[%c0_4, %c0_5], %5 {strides = array<i32>} : memref<2x32xf32, #tpu.memory_space<vmem>>, vector<2x32xf32>,
    return
  }
  func.func @transform_0(%arg0: i32) -> (i32, i32, i32) {
    %c0_i32 = arith.constant 0 : i32
    %c0_i32_0 = arith.constant 0 : i32
    %c0_i32_1 = arith.constant 0 : i32
    return %arg0, %c0_i32, %c0_i32_0 : i32, i32, i32
  }
  func.func @transform_1(%arg0: i32) -> (i32, i32) {
    %c0_i32 = arith.constant 0 : i32
    %c0_i32_0 = arith.constant 0 : i32
    %c0_i32_1 = arith.constant 0 : i32
    return %c0_i32, %c0_i32_0 : i32, i32
  }
  func.func @transform_2(%arg0: i32) -> (i32, i32) {
    %c0_i32 = arith.constant 0 : i32
    %c0_i32_0 = arith.constant 0 : i32
    return %arg0, %c0_i32 : i32, i32
  }
}

</mosaic_0001>

<llo_original>
// kernel: tpu_custom_call.1
$region0: #{tpu_custom_call.1}
  #allocation0 [shape = 'u32[]', space=smem, size = 0x4, offset = 0x4, fixed_abs, tag = 'smem constant byte address 0x4 - core index']
  #allocation1 [shape = 'u32[72,128]{1,0:T(1,128)}', space=vmem, size = 0x9000, scoped, tag = 'internal scratch']
  %s0 = inlined_call_operand.hbm [shape: f32[2,8,32], index: 0, kind: input, shape index: {}]
  %s1 = inlined_call_operand.hbm [shape: f32[1,8], index: 1, kind: input, shape index: {}]
  %s2 = inlined_call_operand.hbm [shape: f32[2,32], index: 2, kind: output, shape index: {}]
  %s3 = sld [smem:[#allocation0]]
  $region26: #{tpu_custom_call.1} parent=0
    _
  %s5 = ssub.s32 1, %s3
  %s6 = scalar_select 0, %s5, %s3
  $region1: #{tpu_custom_call.1} parent=0
    #allocation2 [shape = 'u8[8192]{0}', space=vmem, size = 0x2000, scoped, tag = 'input window, operand 0, single buffered']
    #allocation3 [shape = 's32[1]{0}', space=sflag, size = 0x4, scoped, tag = 'scoped memory for tpu_custom_call.1']
    #allocation4 [shape = 's32[1]{0}', space=sflag, size = 0x4, scoped, tag = 'scoped memory for tpu_custom_call.1']
    #allocation5 [shape = 'u8[512]{0}', space=vmem, size = 0x400, scoped, tag = 'input window, operand 1, single buffered']
    #allocation6 [shape = 's32[1]{0}', space=sflag, size = 0x4, scoped, tag = 'scoped memory for tpu_custom_call.1']
    #allocation7 [shape = 'u8[1024]{0}', space=vmem, size = 0x400, scoped, tag = 'output window, operand 0, single buffered']
    %7 = vsyncpa [#allocation3], 0
    %8 = vsyncpa [#allocation6], 0
    %9 = vsyncpa [#allocation4], 0
    // Predicated region
    $region2: #{tpu_custom_call.1} parent=1 // pred_check
      _
    $region3: #{tpu_custom_call.1} parent=1 // pred_check_branch
      %11 = sbr.rel (0) target = $region5
    $region4: #{tpu_custom_call.1} parent=1 // pred_region
      %13 = vsyncadd [#allocation3], 0
      %s14 = sshll.u32 %s0, 4
      %s15 = int_to_ptr.hbm [resolvable:$true] %s14
      %s16 = sshll.u32 [#allocation2], 4
      %s17 = int_to_ptr.vmem [resolvable:$true] %s16
      %22 = dma.hbm_to_vmem [thread:$0]  %s15, 256, %s17, [#allocation3], 128, 128, 8
    $region5: #{tpu_custom_call.1} parent=1 // pred_fallthru
      _
    // Predicated region
    $region6: #{tpu_custom_call.1} parent=1 // pred_check
      _
    $region7: #{tpu_custom_call.1} parent=1 // pred_check_branch
      %24 = sbr.rel (0) target = $region9
    $region8: #{tpu_custom_call.1} parent=1 // pred_region
      %26 = vsyncadd [#allocation6], 0
      %s28 = sshll.u32 %s1, 4
      %s29 = int_to_ptr.hbm [resolvable:$true] %s28
      %s30 = sshll.u32 [#allocation5], 4
      %s31 = int_to_ptr.vmem [resolvable:$true] %s30
      %33 = dma.hbm_to_vmem [thread:$0]  %s29, 16, %s31, [#allocation6]
    $region9: #{tpu_custom_call.1} parent=1 // pred_fallthru
      _
    // Predicated region
    $region10: #{tpu_custom_call.1} parent=1 // pred_check
      _
    $region11: #{tpu_custom_call.1} parent=1 // pred_check_branch
      %35 = sbr.rel (0) target = $region13
    $region12: #{tpu_custom_call.1} parent=1 // pred_region
      %37 = dma.done [#allocation3], 256
    $region13: #{tpu_custom_call.1} parent=1 // pred_fallthru
      _
    // Predicated region
    $region14: #{tpu_custom_call.1} parent=1 // pred_check
      _
    $region15: #{tpu_custom_call.1} parent=1 // pred_check_branch
      %39 = sbr.rel (0) target = $region17
    $region16: #{tpu_custom_call.1} parent=1 // pred_region
      %41 = dma.done [#allocation6], 16
    $region17: #{tpu_custom_call.1} parent=1 // pred_fallthru
      _
    %v42 = vld [vmem:[#allocation2] sm:$0xff]
    %v43 = vld [vmem:[#allocation2 + $0x8] sm:$0xff]
    %v44 = vld [vmem:[#allocation5] sm:$0x1]
    %v45 = vperm.slane %v44, 0
    %v46 = vlaneseq
    %v47 = vshrl.u32 %v46, 7
    %49 = vset.pattern.permute.xlu0 %v47
    %50 = vperm.xlu0 %49, %v45
    %v51 = vpop.permute.xlu0 %50
    %v52 = vmul.f32 %v42, %v51
    %v53 = vmul.f32 %v43, %v51
    %vm54 = vcmask 261120
    %v55 = vsel %vm54, %v52, 0.0
    %v56 = vrot.slane %v55, 4
    %v57 = vadd.f32 %v55, %v56
    %v58 = vrot.slane %v57, 2
    %v59 = vadd.f32 %v57, %v58
    %v60 = vrot.slane %v59, 1
    %v61 = vadd.f32 %v59, %v60
    %v62 = vsel %vm54, %v53, 0.0
    %v63 = vrot.slane %v62, 4
    %v64 = vadd.f32 %v62, %v63
    %v65 = vrot.slane %v64, 2
    %v66 = vadd.f32 %v64, %v65
    %v67 = vrot.slane %v66, 1
    %v68 = vadd.f32 %v66, %v67
    %vm71 = vcmask 1041409
    %v72 = vsel %vm71, %v68, %v61
    %vm74 = vcmask 254976
    %75 = vst.msk [vmem:[#allocation7] sm:$0x3] %vm74, %v72
    // Predicated region
    $region18: #{tpu_custom_call.1} parent=1 // pred_check
      _
    $region19: #{tpu_custom_call.1} parent=1 // pred_check_branch
      %77 = sbr.rel (0) target = $region21
    $region20: #{tpu_custom_call.1} parent=1 // pred_region
      %79 = vsyncadd [#allocation4], 0
      %s81 = sshll.u32 [#allocation7], 4
      %s82 = int_to_ptr.vmem [resolvable:$true] %s81
      %s83 = sshll.u32 %s2, 4
      %s84 = int_to_ptr.hbm [resolvable:$true] %s83
      %86 = dma.vmem_to_hbm [thread:$0]  %s82, 32, %s84, [#allocation4]
    $region21: #{tpu_custom_call.1} parent=1 // pred_fallthru
      _
    // Predicated region
    $region22: #{tpu_custom_call.1} parent=1 // pred_check
      _
    $region23: #{tpu_custom_call.1} parent=1 // pred_check_branch
      %88 = sbr.rel (0) target = $region25
    $region24: #{tpu_custom_call.1} parent=1 // pred_region
      %90 = dma.done [#allocation4], 32
    $region25: #{tpu_custom_call.1} parent=1 // pred_fallthru
      _
    %91 = vsyncpa [#allocation3], 1
    %92 = vsyncpa [#allocation6], 1
    %93 = vsyncpa [#allocation4], 1

</llo_original>
